<compile_context>
chip_gen: v5e
topology: v5e:2x2
jax: 0.10.0
libtpu: 0.0.40
codegen_flags: <defaults>
</compile_context>

<pallas_src>
import jax
import jax.numpy as jnp
from collections import namedtuple
from jax.experimental import pallas as pl
from jax.experimental.pallas import tpu as pltpu

Outputs = namedtuple("Outputs", ["value", "state_out"])


def _round_up(x, m):
    return (x + m - 1) // m * m


def _make_mlp_value_kernel(compute_dtype):
    def kernel(ob_ref, w1_ref, b1_ref, w2_ref, b2_ref, w3_ref, b3_ref, out_ref):
        x = ob_ref[...]
        if x.dtype != compute_dtype:
            # Only convert when the caller did not already store ob in the compute dtype.
            x = x.astype(compute_dtype)

        # layer 1: Linear + ReLU  (bf16 MXU matmul, f32 accumulate; bias/ReLU in f32 — v5e-safe)
        h1 = jnp.dot(x, w1_ref[...], preferred_element_type=jnp.float32) + b1_ref[...]
        h1 = jnp.maximum(h1, 0.0).astype(compute_dtype)

        # layer 2: Linear + ReLU
        h2 = jnp.dot(h1, w2_ref[...], preferred_element_type=jnp.float32) + b2_ref[...]
        h2 = jnp.maximum(h2, 0.0).astype(compute_dtype)

        # value head: v[0, j] = sum_h w3[0, h] * h2[j, h] + b3
        # (1, H) x (tile, H)^T contraction -> (1, tile): lane-dense along batch, so the output
        # store is an unmasked lane-dense vst and the MXU output lanes are filled (N = tile).
        v = jax.lax.dot_general(
            w3_ref[...], h2,
            dimension_numbers=(((1,), (1,)), ((), ())),
            preferred_element_type=jnp.float32,
        ) + b3_ref[0]                       # b3 is a scalar living in SMEM
        out_ref[...] = v.astype(out_ref.dtype)

    return kernel


def value_function_forward(ob, params, state_in=None, *, batch_tile=4096,
                           compute_dtype=jnp.bfloat16, out_dtype=jnp.float32):
    """Pallas implementation of ValueFunction.forward.

    ob: (B, D); ideally stored in bf16 so the HBM read of ob is half-width.
    Returns Outputs(value=(B,), state_out=None).
    """
    w1, b1, w2, b2, w3, b3 = params
    B, D = ob.shape
    H = w1.shape[1]

    ob_item = jnp.dtype(ob.dtype).itemsize
    w_item = jnp.dtype(compute_dtype).itemsize

    # ---- generation-aware VMEM budget -------------------------------------------------
    try:
        vmem_cap = int(pltpu.get_tpu_info().vmem_capacity_bytes)
    except Exception:
        vmem_cap = 64 << 20          # conservative fallback: v7x per-core VMEM
    budget = int(vmem_cap * 0.85)    # leave headroom for compiler-internal scratch

    D_pad = _round_up(D, 128)
    H_pad = _round_up(H, 128)

    def est_vmem(t):
        # double-buffered streaming tiles: ob in, value out ((1, t) pads to 8 sublanes)
        stream = 2 * t * D_pad * ob_item + 2 * 8 * t * 4
        # resident weights / biases (single-buffered), lane+sublane padded
        weights = ((D_pad * H_pad + H_pad * H_pad) * w_item     # W1, W2
                   + 8 * H_pad * w_item                          # w3 row
                   + 2 * 8 * H_pad * 4)                          # b1, b2 rows (f32)
        # in-kernel f32 activations + bf16 copies (h1, h2) + slack
        acts = 2 * t * H_pad * (4 + w_item)
        return stream + weights + acts + (2 << 20)

    # ---- tile / grid selection ---------------------------------------------------------
    # As large as batch_tile / the VMEM budget allow (>=128, multiple of 128), but small
    # enough that the grid has >=2 steps whenever B > 128 (both v7x TensorCores get work).
    tile = max(128, min(_round_up(int(batch_tile), 128),
                        _round_up(pl.cdiv(B, 2), 128)))
    while tile > 128 and est_vmem(tile) > budget:
        tile = max(128, _round_up(tile // 2, 128))

    grid = (pl.cdiv(B, tile),)       # partial last block -> masked output store (no jnp.pad copy)

    # Explicit scoped-VMEM limit on every generation (v5e's default is only 16 MiB),
    # capped below physical capacity (v7x: 64 MiB).
    vmem_limit = int(min(budget, max(int(est_vmem(tile) * 1.5), 32 << 20)))

    # ---- operand preparation -----------------------------------------------------------
    # Matmul operands in the (bf16) compute dtype; biases stay f32 for the VPU add/ReLU path.
    w1c = w1.astype(compute_dtype)
    w2c = w2.astype(compute_dtype)
    w3c = w3.reshape(1, -1).astype(compute_dtype)      # value-head weights as a (1, H) row
    b1c = b1.reshape(1, -1).astype(jnp.float32)
    b2c = b2.reshape(1, -1).astype(jnp.float32)
    b3c = b3.reshape(1).astype(jnp.float32)            # scalar -> SMEM

    kernel = _make_mlp_value_kernel(compute_dtype)

    def _call(single_buffer_weights):
        resident = ({"pipeline_mode": pl.Buffered(1)} if single_buffer_weights else {})
        in_specs = [
            pl.BlockSpec((tile, D), lambda i: (i, 0)),               # ob tile (rows on sublanes)
            pl.BlockSpec((D, H), lambda i: (0, 0), **resident),      # W1 (resident)
            pl.BlockSpec((1, H), lambda i: (0, 0), **resident),      # b1
            pl.BlockSpec((H, H), lambda i: (0, 0), **resident),      # W2 (resident)
            pl.BlockSpec((1, H), lambda i: (0, 0), **resident),      # b2
            pl.BlockSpec((1, H), lambda i: (0, 0), **resident),      # w3 row
            pl.BlockSpec(memory_space=pltpu.MemorySpace.SMEM),       # b3 scalar (no VMEM tile/DMA)
        ]
        return pl.pallas_call(
            kernel,
            out_shape=jax.ShapeDtypeStruct((1, B), out_dtype),
            grid=grid,
            in_specs=in_specs,
            out_specs=pl.BlockSpec((1, tile), lambda i: (0, i)),     # lane-dense value row
            compiler_params=pltpu.CompilerParams(
                dimension_semantics=("parallel",),
                vmem_limit_bytes=vmem_limit,
            ),
        )(ob, w1c, b1c, w2c, b2c, w3c, b3c)

    try:
        out = _call(True)
    except Exception:
        # TODO(synk): pipeline_mode=pl.Buffered(1) rejected by this jax build; weights stay
        # double-buffered (correctness unchanged, ~2x weight VMEM footprint).
        out = _call(False)

    # value.squeeze(-1) from the PyTorch forward (leading-dim squeeze of the (1, B) row).
    value = out[0]
    return Outputs(value=value, state_out=None)


def init_params(key, ob_dim, hidden):
    """Deterministic synthetic parameter init (shapes match the MLP base, (in, out) layout)."""
    k1, k2, k3, k4, k5, k6 = jax.random.split(key, 6)
    w1 = jax.random.normal(k1, (ob_dim, hidden), jnp.float32) * 0.1
    b1 = jax.random.normal(k4, (hidden,), jnp.float32) * 0.05
    w2 = jax.random.normal(k2, (hidden, hidden), jnp.float32) * 0.1
    b2 = jax.random.normal(k5, (hidden,), jnp.float32) * 0.05
    w3 = jax.random.normal(k3, (hidden, 1), jnp.float32) * 0.1
    b3 = jax.random.normal(k6, (1,), jnp.float32) * 0.05
    return (w1, b1, w2, b2, w3, b3)


def _reference_forward(ob, params, compute_dtype=jnp.bfloat16):
    """Pure-JAX reference mirroring the kernel's dtype strategy (bf16 matmuls, f32 accumulate)."""
    w1, b1, w2, b2, w3, b3 = params
    x = ob.astype(compute_dtype)
    h1 = jnp.maximum(
        jnp.dot(x, w1.astype(compute_dtype), preferred_element_type=jnp.float32)
        + b1.reshape(1, -1).astype(jnp.float32), 0.0).astype(compute_dtype)
    h2 = jnp.maximum(
        jnp.dot(h1, w2.astype(compute_dtype), preferred_element_type=jnp.float32)
        + b2.reshape(1, -1).astype(jnp.float32), 0.0).astype(compute_dtype)
    v = (jnp.dot(h2, w3.reshape(-1, 1).astype(compute_dtype),
                 preferred_element_type=jnp.float32)
         + b3.reshape(1, 1).astype(jnp.float32))
    return v[:, 0]


if __name__ == "__main__":
    key = jax.random.PRNGKey(0)
    k_ob, k_params = jax.random.split(key)

    # Ragged batch (not a multiple of 128) exercises the padding-free partial-block path:
    # grid = (2,), second ob/out block is partial and handled via masked output stores.
    B, D, H = 200, 32, 32
    # Store observations in bf16 so the kernel's HBM read of ob is half-width.
    ob = jax.random.normal(k_ob, (B, D), jnp.float32).astype(jnp.bfloat16)
    params = init_params(k_params, D, H)

    out = value_function_forward(ob, params)
    value = jax.block_until_ready(out.value)

    assert value.shape == (B,), value.shape
    assert value.dtype == jnp.float32, value.dtype
    assert out.state_out is None

    ref = _reference_forward(ob, params)
    assert jnp.allclose(value, ref, atol=1e-3, rtol=1e-3), (value, ref)

    print("KERNEL_OK")
</pallas_src>

<mosaic_0001>
module attributes {stable_mosaic.version = 11 : i64} {
  func.func @kernel(%arg0: i32, %arg1: memref<128x32xbf16, #tpu.memory_space<vmem>>, %arg2: memref<32x32xbf16, #tpu.memory_space<vmem>>, %arg3: memref<1x32xf32, #tpu.memory_space<vmem>>, %arg4: memref<32x32xbf16, #tpu.memory_space<vmem>>, %arg5: memref<1x32xf32, #tpu.memory_space<vmem>>, %arg6: memref<1x32xbf16, #tpu.memory_space<vmem>>, %arg7: memref<1xf32, #tpu.memory_space<smem>>, %arg8: memref<1x128xf32, #tpu.memory_space<vmem>>) attributes {dimension_semantics = [#tpu.dimension_semantics<parallel>], iteration_bounds = array<i64: 2>, scalar_prefetch = 0 : i64, scratch_operands = 0 : i64, tpu.core_type = #tpu.core_type<tc>, window_params = [{transform_indices = @transform_0, window_bounds = array<i64: 128, 32>}, {pipeline_mode = #tpu.pipeline_mode<synchronous>, transform_indices = @transform_1, window_bounds = array<i64: 32, 32>}, {pipeline_mode = #tpu.pipeline_mode<synchronous>, transform_indices = @transform_2, window_bounds = array<i64: 1, 32>}, {pipeline_mode = #tpu.pipeline_mode<synchronous>, transform_indices = @transform_3, window_bounds = array<i64: 32, 32>}, {pipeline_mode = #tpu.pipeline_mode<synchronous>, transform_indices = @transform_4, window_bounds = array<i64: 1, 32>}, {pipeline_mode = #tpu.pipeline_mode<synchronous>, transform_indices = @transform_5, window_bounds = array<i64: 1, 32>}, {transform_indices = @transform_6, window_bounds = array<i64: 1>}, {transform_indices = @transform_7, window_bounds = array<i64: 1, 128>}]} {
    %c0 = arith.constant 0 : index
    %c0_0 = arith.constant 0 : index
    %0 = vector.load %arg1[%c0, %c0_0] : memref<128x32xbf16, #tpu.memory_space<vmem>>, vector<128x32xbf16>
    %c0_1 = arith.constant 0 : index
    %c0_2 = arith.constant 0 : index
    %1 = vector.load %arg2[%c0_1, %c0_2] : memref<32x32xbf16, #tpu.memory_space<vmem>>, vector<32x32xbf16>
    %cst = arith.constant dense<0.000000e+00> : vector<128x32xf32>
    %2 = tpu.matmul %0, %1, %cst {dimension_numbers = #tpu.dot_dimension_numbers<[1], [0], [0], [1], [0, 0, 1, 1], [], []>} : vector<128x32xbf16>, vector<32x32xbf16>, vector<128x32xf32> -> vector<128x32xf32>
    %c0_3 = arith.constant 0 : index
    %c0_4 = arith.constant 0 : index
    %3 = vector.load %arg3[%c0_3, %c0_4] : memref<1x32xf32, #tpu.memory_space<vmem>>, vector<1x32xf32>
    %4 = vector.broadcast %3 : vector<1x32xf32> to vector<128x32xf32>
    %5 = arith.addf %2, %4 : vector<128x32xf32>
    %cst_5 = arith.constant 0.000000e+00 : f32
    %6 = vector.broadcast %cst_5 : f32 to vector<128x32xf32>
    %7 = arith.maximumf %5, %6 : vector<128x32xf32>
    %8 = arith.truncf %7 : vector<128x32xf32> to vector<128x32xbf16>
    %c0_6 = arith.constant 0 : index
    %c0_7 = arith.constant 0 : index
    %9 = vector.load %arg4[%c0_6, %c0_7] : memref<32x32xbf16, #tpu.memory_space<vmem>>, vector<32x32xbf16>
    %cst_8 = arith.constant dense<0.000000e+00> : vector<128x32xf32>
    %10 = tpu.matmul %8, %9, %cst_8 {dimension_numbers = #tpu.dot_dimension_numbers<[1], [0], [0], [1], [0, 0, 1, 1], [], []>} : vector<128x32xbf16>, vector<32x32xbf16>, vector<128x32xf32> -> vector<128x32xf32>
    %c0_9 = arith.constant 0 : index
    %c0_10 = arith.constant 0 : index
    %11 = vector.load %arg5[%c0_9, %c0_10] : memref<1x32xf32, #tpu.memory_space<vmem>>, vector<1x32xf32>
    %12 = vector.broadcast %11 : vector<1x32xf32> to vector<128x32xf32>
    %13 = arith.addf %10, %12 : vector<128x32xf32>
    %cst_11 = arith.constant 0.000000e+00 : f32
    %14 = vector.broadcast %cst_11 : f32 to vector<128x32xf32>
    %15 = arith.maximumf %13, %14 : vector<128x32xf32>
    %16 = arith.truncf %15 : vector<128x32xf32> to vector<128x32xbf16>
    %c0_12 = arith.constant 0 : index
    %c0_13 = arith.constant 0 : index
    %17 = vector.load %arg6[%c0_12, %c0_13] : memref<1x32xbf16, #tpu.memory_space<vmem>>, vector<1x32xbf16>
    %cst_14 = arith.constant dense<0.000000e+00> : vector<1x128xf32>
    %18 = tpu.matmul %17, %16, %cst_14 {dimension_numbers = #tpu.dot_dimension_numbers<[1], [1], [0], [0], [0, 0, 1, 0], [], []>} : vector<1x32xbf16>, vector<128x32xbf16>, vector<1x128xf32> -> vector<1x128xf32>
    %c0_15 = arith.constant 0 : index
    %19 = memref.load %arg7[%c0_15] : memref<1xf32, #tpu.memory_space<smem>>
    %20 = vector.broadcast %19 : f32 to vector<1x128xf32>
    %21 = arith.addf %18, %20 : vector<1x128xf32>
    %c0_16 = arith.constant 0 : index
    %c0_17 = arith.constant 0 : index
    %22 = vector.load %arg8[%c0_16, %c0_17] : memref<1x128xf32, #tpu.memory_space<vmem>>, vector<1x128xf32>
    tpu.vector_store %arg8[%c0_16, %c0_17], %21 {strides = array<i32>} : memref<1x128xf32, #tpu.memory_space<vmem>>, vector<1x128xf32>,
    return
  }
  func.func @transform_0(%arg0: i32) -> (i32, i32) {
    %c0_i32 = arith.constant 0 : i32
    %c0_i32_0 = arith.constant 0 : i32
    return %arg0, %c0_i32 : i32, i32
  }
  func.func @transform_1(%arg0: i32) -> (i32, i32) {
    %c0_i32 = arith.constant 0 : i32
    %c0_i32_0 = arith.constant 0 : i32
    %c0_i32_1 = arith.constant 0 : i32
    return %c0_i32, %c0_i32_0 : i32, i32
  }
  func.func @transform_2(%arg0: i32) -> (i32, i32) {
    %c0_i32 = arith.constant 0 : i32
    %c0_i32_0 = arith.constant 0 : i32
    %c0_i32_1 = arith.constant 0 : i32
    return %c0_i32, %c0_i32_0 : i32, i32
  }
  func.func @transform_3(%arg0: i32) -> (i32, i32) {
    %c0_i32 = arith.constant 0 : i32
    %c0_i32_0 = arith.constant 0 : i32
    %c0_i32_1 = arith.constant 0 : i32
    return %c0_i32, %c0_i32_0 : i32, i32
  }
  func.func @transform_4(%arg0: i32) -> (i32, i32) {
    %c0_i32 = arith.constant 0 : i32
    %c0_i32_0 = arith.constant 0 : i32
    %c0_i32_1 = arith.constant 0 : i32
    return %c0_i32, %c0_i32_0 : i32, i32
  }
  func.func @transform_5(%arg0: i32) -> (i32, i32) {
    %c0_i32 = arith.constant 0 : i32
    %c0_i32_0 = arith.constant 0 : i32
    %c0_i32_1 = arith.constant 0 : i32
    return %c0_i32, %c0_i32_0 : i32, i32
  }
  func.func @transform_6(%arg0: i32) -> i32 {
    %c0_i32 = arith.constant 0 : i32
    %c0_i32_0 = arith.constant 0 : i32
    return %c0_i32 : i32
  }
  func.func @transform_7(%arg0: i32) -> (i32, i32) {
    %c0_i32 = arith.constant 0 : i32
    %c0_i32_0 = arith.constant 0 : i32
    return %c0_i32, %arg0 : i32, i32
  }
}

module attributes {stable_mosaic.version = 11 : i64} {
  func.func @kernel(%arg0: i32, %arg1: memref<128x32xbf16, #tpu.memory_space<vmem>>, %arg2: memref<32x32xbf16, #tpu.memory_space<vmem>>, %arg3: memref<1x32xf32, #tpu.memory_space<vmem>>, %arg4: memref<32x32xbf16, #tpu.memory_space<vmem>>, %arg5: memref<1x32xf32, #tpu.memory_space<vmem>>, %arg6: memref<1x32xbf16, #tpu.memory_space<vmem>>, %arg7: memref<1xf32, #tpu.memory_space<smem>>, %arg8: memref<1x128xf32, #tpu.memory_space<vmem>>) attributes {dimension_semantics = [#tpu.dimension_semantics<parallel>], iteration_bounds = array<i64: 2>, scalar_prefetch = 0 : i64, scratch_operands = 0 : i64, tpu.core_type = #tpu.core_type<tc>, window_params = [{transform_indices = @transform_0, window_bounds = array<i64: 128, 32>}, {pipeline_mode = #tpu.pipeline_mode<synchronous>, transform_indices = @transform_1, window_bounds = array<i64: 32, 32>}, {pipeline_mode = #tpu.pipeline_mode<synchronous>, transform_indices = @transform_2, window_bounds = array<i64: 1, 32>}, {pipeline_mode = #tpu.pipeline_mode<synchronous>, transform_indices = @transform_3, window_bounds = array<i64: 32, 32>}, {pipeline_mode = #tpu.pipeline_mode<synchronous>, transform_indices = @transform_4, window_bounds = array<i64: 1, 32>}, {pipeline_mode = #tpu.pipeline_mode<synchronous>, transform_indices = @transform_5, window_bounds = array<i64: 1, 32>}, {transform_indices = @transform_6, window_bounds = array<i64: 1>}, {transform_indices = @transform_7, window_bounds = array<i64: 1, 128>}]} {
    %c0 = arith.constant 0 : index
    %c0_0 = arith.constant 0 : index
    %0 = vector.load %arg1[%c0, %c0_0] : memref<128x32xbf16, #tpu.memory_space<vmem>>, vector<128x32xbf16>
    %c0_1 = arith.constant 0 : index
    %c0_2 = arith.constant 0 : index
    %1 = vector.load %arg2[%c0_1, %c0_2] : memref<32x32xbf16, #tpu.memory_space<vmem>>, vector<32x32xbf16>
    %cst = arith.constant dense<0.000000e+00> : vector<128x32xf32>
    %2 = tpu.matmul %0, %1, %cst {dimension_numbers = #tpu.dot_dimension_numbers<[1], [0], [0], [1], [0, 0, 1, 1], [], []>} : vector<128x32xbf16>, vector<32x32xbf16>, vector<128x32xf32> -> vector<128x32xf32>
    %c0_3 = arith.constant 0 : index
    %c0_4 = arith.constant 0 : index
    %3 = vector.load %arg3[%c0_3, %c0_4] : memref<1x32xf32, #tpu.memory_space<vmem>>, vector<1x32xf32>
    %4 = vector.broadcast %3 : vector<1x32xf32> to vector<128x32xf32>
    %5 = arith.addf %2, %4 : vector<128x32xf32>
    %cst_5 = arith.constant 0.000000e+00 : f32
    %6 = vector.broadcast %cst_5 : f32 to vector<128x32xf32>
    %7 = arith.maximumf %5, %6 : vector<128x32xf32>
    %8 = arith.truncf %7 : vector<128x32xf32> to vector<128x32xbf16>
    %c0_6 = arith.constant 0 : index
    %c0_7 = arith.constant 0 : index
    %9 = vector.load %arg4[%c0_6, %c0_7] : memref<32x32xbf16, #tpu.memory_space<vmem>>, vector<32x32xbf16>
    %cst_8 = arith.constant dense<0.000000e+00> : vector<128x32xf32>
    %10 = tpu.matmul %8, %9, %cst_8 {dimension_numbers = #tpu.dot_dimension_numbers<[1], [0], [0], [1], [0, 0, 1, 1], [], []>} : vector<128x32xbf16>, vector<32x32xbf16>, vector<128x32xf32> -> vector<128x32xf32>
    %c0_9 = arith.constant 0 : index
    %c0_10 = arith.constant 0 : index
    %11 = vector.load %arg5[%c0_9, %c0_10] : memref<1x32xf32, #tpu.memory_space<vmem>>, vector<1x32xf32>
    %12 = vector.broadcast %11 : vector<1x32xf32> to vector<128x32xf32>
    %13 = arith.addf %10, %12 : vector<128x32xf32>
    %cst_11 = arith.constant 0.000000e+00 : f32
    %14 = vector.broadcast %cst_11 : f32 to vector<128x32xf32>
    %15 = arith.maximumf %13, %14 : vector<128x32xf32>
    %16 = arith.truncf %15 : vector<128x32xf32> to vector<128x32xbf16>
    %c0_12 = arith.constant 0 : index
    %c0_13 = arith.constant 0 : index
    %17 = vector.load %arg6[%c0_12, %c0_13] : memref<1x32xbf16, #tpu.memory_space<vmem>>, vector<1x32xbf16>
    %cst_14 = arith.constant dense<0.000000e+00> : vector<1x128xf32>
    %18 = tpu.matmul %17, %16, %cst_14 {dimension_numbers = #tpu.dot_dimension_numbers<[1], [1], [0], [0], [0, 0, 1, 0], [], []>} : vector<1x32xbf16>, vector<128x32xbf16>, vector<1x128xf32> -> vector<1x128xf32>
    %c0_15 = arith.constant 0 : index
    %19 = memref.load %arg7[%c0_15] : memref<1xf32, #tpu.memory_space<smem>>
    %20 = vector.broadcast %19 : f32 to vector<1x128xf32>
    %21 = arith.addf %18, %20 : vector<1x128xf32>
    %c0_16 = arith.constant 0 : index
    %c0_17 = arith.constant 0 : index
    %22 = vector.load %arg8[%c0_16, %c0_17] : memref<1x128xf32, #tpu.memory_space<vmem>>, vector<1x128xf32>
    tpu.vector_store %arg8[%c0_16, %c0_17], %21 {strides = array<i32>} : memref<1x128xf32, #tpu.memory_space<vmem>>, vector<1x128xf32>,
    return
  }
  func.func @transform_0(%arg0: i32) -> (i32, i32) {
    %c0_i32 = arith.constant 0 : i32
    %c0_i32_0 = arith.constant 0 : i32
    return %arg0, %c0_i32 : i32, i32
  }
  func.func @transform_1(%arg0: i32) -> (i32, i32) {
    %c0_i32 = arith.constant 0 : i32
    %c0_i32_0 = arith.constant 0 : i32
    %c0_i32_1 = arith.constant 0 : i32
    return %c0_i32, %c0_i32_0 : i32, i32
  }
  func.func @transform_2(%arg0: i32) -> (i32, i32) {
    %c0_i32 = arith.constant 0 : i32
    %c0_i32_0 = arith.constant 0 : i32
    %c0_i32_1 = arith.constant 0 : i32
    return %c0_i32, %c0_i32_0 : i32, i32
  }
  func.func @transform_3(%arg0: i32) -> (i32, i32) {
    %c0_i32 = arith.constant 0 : i32
    %c0_i32_0 = arith.constant 0 : i32
    %c0_i32_1 = arith.constant 0 : i32
    return %c0_i32, %c0_i32_0 : i32, i32
  }
  func.func @transform_4(%arg0: i32) -> (i32, i32) {
    %c0_i32 = arith.constant 0 : i32
    %c0_i32_0 = arith.constant 0 : i32
    %c0_i32_1 = arith.constant 0 : i32
    return %c0_i32, %c0_i32_0 : i32, i32
  }
  func.func @transform_5(%arg0: i32) -> (i32, i32) {
    %c0_i32 = arith.constant 0 : i32
    %c0_i32_0 = arith.constant 0 : i32
    %c0_i32_1 = arith.constant 0 : i32
    return %c0_i32, %c0_i32_0 : i32, i32
  }
  func.func @transform_6(%arg0: i32) -> i32 {
    %c0_i32 = arith.constant 0 : i32
    %c0_i32_0 = arith.constant 0 : i32
    return %c0_i32 : i32
  }
  func.func @transform_7(%arg0: i32) -> (i32, i32) {
    %c0_i32 = arith.constant 0 : i32
    %c0_i32_0 = arith.constant 0 : i32
    return %c0_i32, %arg0 : i32, i32
  }
}

</mosaic_0001>

<llo_original>
// kernel: tpu_custom_call.1
$region0: #{tpu_custom_call.1}
  #allocation0 [shape = 'u32[]', space=smem, size = 0x4, offset = 0x4, fixed_abs, tag = 'smem constant byte address 0x4 - core index']
  #allocation1 [shape = 'u32[72,128]{1,0:T(1,128)}', space=vmem, size = 0x9000, scoped, tag = 'internal scratch']
  #allocation2 [shape = 'f32[1]{0:T(128)S(6)}', space=smem, size = 0x200, scoped, tag = 'scoped memory for tpu_custom_call.1']
  %s0 = inlined_call_operand.vmem [shape: bf16[200,32], index: 0, kind: input, shape index: {}]
  %s1 = inlined_call_operand.vmem [shape: bf16[32,32], index: 1, kind: input, shape index: {}]
  %s2 = inlined_call_operand.vmem [shape: f32[1,32], index: 2, kind: input, shape index: {}]
  %s3 = inlined_call_operand.vmem [shape: bf16[32,32], index: 3, kind: input, shape index: {}]
  %s4 = inlined_call_operand.vmem [shape: f32[1,32], index: 4, kind: input, shape index: {}]
  %s5 = inlined_call_operand.vmem [shape: bf16[1,32], index: 5, kind: input, shape index: {}]
  %s6 = inlined_call_operand.<no memory space> [shape: f32[1], index: 6, kind: input, shape index: {}]
  %s7 = inlined_call_operand.hbm [shape: f32[1,200], index: 7, kind: output, shape index: {}]
  %s8 = sld [smem:[#allocation0]]
  $region61: #{tpu_custom_call.1} parent=0
    _
  %s10 = ssub.s32 1, %s8
  %s11 = scalar_select 0, %s10, %s8
  %12 = sst [smem:[#allocation2]] %s6
  $region1: #{tpu_custom_call.1} parent=0
    #allocation3 [shape = 'u8[1024]{0}', space=vmem, size = 0x400, scoped, tag = 'output window, operand 0']
    #allocation4 [shape = 's32[2]{0}', space=sflag, size = 0x8, scoped, tag = 'scoped memory for tpu_custom_call.1']
    %13 = vsyncpa [#allocation4], 0
    %s14 = scalar_lea.sflag [#allocation4], 1
    %15 = vsyncpa %s14, 0
    loop: start=0, step=1, limit=4
    $region2: #{tpu_custom_call.1} parent=1 // loop_pre_header
      _
    $region3: #{tpu_custom_call.1} parent=1 // loop_header
      %s17 = sphi 0, %s21
      %p18 = scmp.ge.s32.totalorder %s17, 4
      %s27 = sphi 0, %s29
      %s30 = sphi 0, %s27
      %s31 = sphi 0, %s30
      %s47 = sphi 0, %s31
      %s51 = sphi 0, %s51
      %s53 = sphi 0, %s51
      %s54 = sphi 0, %s53
      %s68 = sphi 0, %s54
      %s72 = sphi 0, %s72
      %s74 = sphi 0, %s72
      %s75 = sphi 0, %s74
      %s89 = sphi 0, %s75
      %s93 = sphi 0, %s93
      %s95 = sphi 0, %s93
      %s96 = sphi 0, %s95
      %s110 = sphi 0, %s96
      %s114 = sphi 0, %s114
      %s116 = sphi 0, %s114
      %s117 = sphi 0, %s116
      %s131 = sphi 0, %s117
      %s135 = sphi 0, %s135
      %s137 = sphi 0, %s135
      %s138 = sphi 0, %s137
      %s152 = sphi 0, %s138
      %s156 = sphi 0, %s156
      %s158 = sphi 0, %s156
      %s159 = sphi 0, %s158
      %s173 = sphi 0, %s159
      %s179 = sphi 0, %s181
      %s182 = sphi 0, %s179
      %s183 = sphi 0, %s182
      %s199 = sphi 0, %s183
    $region4: #{tpu_custom_call.1} parent=1 // loop_header_branch
      %20 = sbr.rel (%p18) target = $region8
    $region5: #{tpu_custom_call.1} parent=1 // loop_body
      %s22 = ssub.s32 %s17, 1
      %s23 = ssub.s32 %s17, 2
      %s24 = sadd.s32 %s17, 1
      %s25 = ssub.s32 %s17, %s24
      %p26 = scmp.eq.s32.totalorder %s25, 0
      %s28 = sadd.s32 %s27, 1
      %s29 = scalar_select %p26, %s27, %s28
      %p32 = pneg %p26
      %p33 = scmp.eq.s32.totalorder %s17, 1
      %p34 = por %p32, %p33
      %p35 = scmp.ne.s32.totalorder %s27, %s30
      %p36 = scmp.eq.s32.totalorder %s17, 0
      %p37 = por %p35, %p36
      %p38 = scmp.ne.s32.totalorder %s27, %s30
      %p39 = scmp.eq.s32.totalorder %s22, 1
      %p40 = por %p38, %p39
      %p41 = scmp.ne.s32.totalorder %s30, %s31
      %p42 = scmp.eq.s32.totalorder %s22, 0
      %p43 = por %p41, %p42
      %p44 = scmp.ne.s32.totalorder %s30, %s31
      %p45 = scmp.eq.s32.totalorder %s23, 1
      %p46 = por %p44, %p45
      %p48 = scmp.ne.s32.totalorder %s31, %s47
      %p49 = scmp.eq.s32.totalorder %s23, 0
      %p50 = por %p48, %p49
      %s52 = sadd.s32 %s51, 1
      %p55 = scmp.eq.s32.totalorder %s17, 1
      %p56 = scmp.ne.s32.totalorder %s51, %s53
      %p57 = scmp.eq.s32.totalorder %s17, 0
      %p58 = por %p56, %p57
      %p59 = scmp.ne.s32.totalorder %s51, %s53
      %p60 = scmp.eq.s32.totalorder %s22, 1
      %p61 = por %p59, %p60
      %p62 = scmp.ne.s32.totalorder %s53, %s54
      %p63 = scmp.eq.s32.totalorder %s22, 0
      %p64 = por %p62, %p63
      %p65 = scmp.ne.s32.totalorder %s53, %s54
      %p66 = scmp.eq.s32.totalorder %s23, 1
      %p67 = por %p65, %p66
      %p69 = scmp.ne.s32.totalorder %s54, %s68
      %p70 = scmp.eq.s32.totalorder %s23, 0
      %p71 = por %p69, %p70
      %s73 = sadd.s32 %s72, 1
      %p76 = scmp.eq.s32.totalorder %s17, 1
      %p77 = scmp.ne.s32.totalorder %s72, %s74
      %p78 = scmp.eq.s32.totalorder %s17, 0
      %p79 = por %p77, %p78
      %p80 = scmp.ne.s32.totalorder %s72, %s74
      %p81 = scmp.eq.s32.totalorder %s22, 1
      %p82 = por %p80, %p81
      %p83 = scmp.ne.s32.totalorder %s74, %s75
      %p84 = scmp.eq.s32.totalorder %s22, 0
      %p85 = por %p83, %p84
      %p86 = scmp.ne.s32.totalorder %s74, %s75
      %p87 = scmp.eq.s32.totalorder %s23, 1
      %p88 = por %p86, %p87
      %p90 = scmp.ne.s32.totalorder %s75, %s89
      %p91 = scmp.eq.s32.totalorder %s23, 0
      %p92 = por %p90, %p91
      %s94 = sadd.s32 %s93, 1
      %p97 = scmp.eq.s32.totalorder %s17, 1
      %p98 = scmp.ne.s32.totalorder %s93, %s95
      %p99 = scmp.eq.s32.totalorder %s17, 0
      %p100 = por %p98, %p99
      %p101 = scmp.ne.s32.totalorder %s93, %s95
      %p102 = scmp.eq.s32.totalorder %s22, 1
      %p103 = por %p101, %p102
      %p104 = scmp.ne.s32.totalorder %s95, %s96
      %p105 = scmp.eq.s32.totalorder %s22, 0
      %p106 = por %p104, %p105
      %p107 = scmp.ne.s32.totalorder %s95, %s96
      %p108 = scmp.eq.s32.totalorder %s23, 1
      %p109 = por %p107, %p108
      %p111 = scmp.ne.s32.totalorder %s96, %s110
      %p112 = scmp.eq.s32.totalorder %s23, 0
      %p113 = por %p111, %p112
      %s115 = sadd.s32 %s114, 1
      %p118 = scmp.eq.s32.totalorder %s17, 1
      %p119 = scmp.ne.s32.totalorder %s114, %s116
      %p120 = scmp.eq.s32.totalorder %s17, 0
      %p121 = por %p119, %p120
      %p122 = scmp.ne.s32.totalorder %s114, %s116
      %p123 = scmp.eq.s32.totalorder %s22, 1
      %p124 = por %p122, %p123
      %p125 = scmp.ne.s32.totalorder %s116, %s117
      %p126 = scmp.eq.s32.totalorder %s22, 0
      %p127 = por %p125, %p126
      %p128 = scmp.ne.s32.totalorder %s116, %s117
      %p129 = scmp.eq.s32.totalorder %s23, 1
      %p130 = por %p128, %p129
      %p132 = scmp.ne.s32.totalorder %s117, %s131
      %p133 = scmp.eq.s32.totalorder %s23, 0
      %p134 = por %p132, %p133
      %s136 = sadd.s32 %s135, 1
      %p139 = scmp.eq.s32.totalorder %s17, 1
      %p140 = scmp.ne.s32.totalorder %s135, %s137
      %p141 = scmp.eq.s32.totalorder %s17, 0
      %p142 = por %p140, %p141
      %p143 = scmp.ne.s32.totalorder %s135, %s137
      %p144 = scmp.eq.s32.totalorder %s22, 1
      %p145 = por %p143, %p144
      %p146 = scmp.ne.s32.totalorder %s137, %s138
      %p147 = scmp.eq.s32.totalorder %s22, 0
      %p148 = por %p146, %p147
      %p149 = scmp.ne.s32.totalorder %s137, %s138
      %p150 = scmp.eq.s32.totalorder %s23, 1
      %p151 = por %p149, %p150
      %p153 = scmp.ne.s32.totalorder %s138, %s152
      %p154 = scmp.eq.s32.totalorder %s23, 0
      %p155 = por %p153, %p154
      %s157 = sadd.s32 %s156, 1
      %p160 = scmp.eq.s32.totalorder %s17, 1
      %p161 = scmp.ne.s32.totalorder %s156, %s158
      %p162 = scmp.eq.s32.totalorder %s17, 0
      %p163 = por %p161, %p162
      %p164 = scmp.ne.s32.totalorder %s156, %s158
      %p165 = scmp.eq.s32.totalorder %s22, 1
      %p166 = por %p164, %p165
      %p167 = scmp.ne.s32.totalorder %s158, %s159
      %p168 = scmp.eq.s32.totalorder %s22, 0
      %p169 = por %p167, %p168
      %p170 = scmp.ne.s32.totalorder %s158, %s159
      %p171 = scmp.eq.s32.totalorder %s23, 1
      %p172 = por %p170, %p171
      %p174 = scmp.ne.s32.totalorder %s159, %s173
      %p175 = scmp.eq.s32.totalorder %s23, 0
      %p176 = por %p174, %p175
      %s177 = ssub.s32 %s17, %s24
      %p178 = scmp.eq.s32.totalorder %s177, 0
      %s180 = sadd.s32 %s179, 1
      %s181 = scalar_select %p178, %s179, %s180
      %p184 = pneg %p178
      %p185 = scmp.eq.s32.totalorder %s17, 1
      %p186 = por %p184, %p185
      %p187 = scmp.ne.s32.totalorder %s179, %s182
      %p188 = scmp.eq.s32.totalorder %s17, 0
      %p189 = por %p187, %p188
      %p190 = scmp.ne.s32.totalorder %s179, %s182
      %p191 = scmp.eq.s32.totalorder %s22, 1
      %p192 = por %p190, %p191
      %p193 = scmp.ne.s32.totalorder %s182, %s183
      %p194 = scmp.eq.s32.totalorder %s22, 0
      %p195 = por %p193, %p194
      %p196 = scmp.ne.s32.totalorder %s182, %s183
      %p197 = scmp.eq.s32.totalorder %s23, 1
      %p198 = por %p196, %p197
      %p200 = scmp.ne.s32.totalorder %s183, %s199
      %p201 = scmp.eq.s32.totalorder %s23, 0
      %p202 = por %p200, %p201
      %p203 = scmp.le.s32.totalorder 1, %s17
      %p204 = scmp.lt.s32.totalorder %s17, 3
      %p205 = pnand %p203, %p204
      %p206 = pneg %p205
      // Predicated region
      $region9: #{tpu_custom_call.1} parent=5 // pred_check
        _
      $region10: #{tpu_custom_call.1} parent=5 // pred_check_branch
        %208 = sbr.rel (%p205) target = $region12
      $region11: #{tpu_custom_call.1} parent=5 // pred_region
        %s209 = ssub.s32 %s17, 1
        // Predicated region
        $region13: #{tpu_custom_call.1} parent=11 // pred_check
          %p210 = pneg %p64
        $region14: #{tpu_custom_call.1} parent=11 // pred_check_branch
          %212 = sbr.rel (%p210) target = $region16
        $region15: #{tpu_custom_call.1} parent=11 // pred_region
          _
        $region16: #{tpu_custom_call.1} parent=11 // pred_fallthru
          _
        // Predicated region
        $region17: #{tpu_custom_call.1} parent=11 // pred_check
          %p213 = pneg %p85
        $region18: #{tpu_custom_call.1} parent=11 // pred_check_branch
          %215 = sbr.rel (%p213) target = $region20
        $region19: #{tpu_custom_call.1} parent=11 // pred_region
          _
        $region20: #{tpu_custom_call.1} parent=11 // pred_fallthru
          _
        // Predicated region
        $region21: #{tpu_custom_call.1} parent=11 // pred_check
          %p216 = pneg %p106
        $region22: #{tpu_custom_call.1} parent=11 // pred_check_branch
          %218 = sbr.rel (%p216) target = $region24
        $region23: #{tpu_custom_call.1} parent=11 // pred_region
          _
        $region24: #{tpu_custom_call.1} parent=11 // pred_fallthru
          _
        // Predicated region
        $region25: #{tpu_custom_call.1} parent=11 // pred_check
          %p219 = pneg %p127
        $region26: #{tpu_custom_call.1} parent=11 // pred_check_branch
          %221 = sbr.rel (%p219) target = $region28
        $region27: #{tpu_custom_call.1} parent=11 // pred_region
          _
        $region28: #{tpu_custom_call.1} parent=11 // pred_fallthru
          _
        // Predicated region
        $region29: #{tpu_custom_call.1} parent=11 // pred_check
          %p222 = pneg %p148
        $region30: #{tpu_custom_call.1} parent=11 // pred_check_branch
          %224 = sbr.rel (%p222) target = $region32
        $region31: #{tpu_custom_call.1} parent=11 // pred_region
          _
        $region32: #{tpu_custom_call.1} parent=11 // pred_fallthru
          _
        // Predicated region
        $region33: #{tpu_custom_call.1} parent=11 // pred_check
          %p225 = pneg %p169
        $region34: #{tpu_custom_call.1} parent=11 // pred_check_branch
          %227 = sbr.rel (%p225) target = $region36
        $region35: #{tpu_custom_call.1} parent=11 // pred_region
          _
        $region36: #{tpu_custom_call.1} parent=11 // pred_fallthru
          _
      $region12: #{tpu_custom_call.1} parent=5 // pred_fallthru
        _
      %p228 = scmp.lt.s32.totalorder %s17, 2
      // Predicated region
      $region37: #{tpu_custom_call.1} parent=5 // pred_check
        %p229 = pneg %p228
      $region38: #{tpu_custom_call.1} parent=5 // pred_check_branch
        %231 = sbr.rel (%p229) target = $region40
      $region39: #{tpu_custom_call.1} parent=5 // pred_region
        // Predicated region
        $region41: #{tpu_custom_call.1} parent=39 // pred_check
          %p232 = pneg %p37
        $region42: #{tpu_custom_call.1} parent=39 // pred_check_branch
          %234 = sbr.rel (%p232) target = $region44
        $region43: #{tpu_custom_call.1} parent=39 // pred_region
          %s235 = smul.u32 16, %s17
          %s236 = ssub.s32 25, %s235
          %p237 = scmp.lt.s32.totalorder %s236, 16
          %s238 = scalar_select %p237, %s236, 16
          %s239 = smul.u32 4, %s238
          %p240 = scmp.lt.s32.totalorder %s235, 24
          %s241 = scalar_select %p240, %s235, 24
          %s242 = smul.addr %s241, 4
          %s243 = scalar_lea.vmem %s0, %s242
          %s244 = smul.u32 16, %s17
          %s245 = ssub.s32 25, %s244
          %p246 = scmp.lt.s32.totalorder %s245, 16
          %s247 = scalar_select %p246, %s245, 16
          %s248 = smul.u32 4, %s247
        $region44: #{tpu_custom_call.1} parent=39 // pred_fallthru
          _
      $region40: #{tpu_custom_call.1} parent=5 // pred_fallthru
        _
      %p249 = scmp.le.s32.totalorder 1, %s17
      %p250 = scmp.lt.s32.totalorder %s17, 3
      %p251 = pnand %p249, %p250
      %p252 = pneg %p251
      // Predicated region
      $region45: #{tpu_custom_call.1} parent=5 // pred_check
        _
      $region46: #{tpu_custom_call.1} parent=5 // pred_check_branch
        %254 = sbr.rel (%p251) target = $region48
      $region47: #{tpu_custom_call.1} parent=5 // pred_region
        %s255 = ssub.s32 %s17, 1
        %s256 = smul.u32 16, %s22
        %s257 = ssub.s32 25, %s256
        %p258 = scmp.lt.s32.totalorder %s257, 16
        %s259 = scalar_select %p258, %s257, 16
        %s260 = smul.u32 4, %s259
        %p261 = scmp.lt.s32.totalorder %s256, 24
        %s262 = scalar_select %p261, %s256, 24
        %s263 = smul.addr %s262, 4
        %s264 = scalar_lea.vmem %s0, %s263
        %p265 = pneg %p43
        %p266 = pneg %p40
        %p267 = pneg %p64
        %p268 = pneg %p61
        %p269 = pneg %p85
        %p270 = pneg %p82
        %p271 = pneg %p106
        %p272 = pneg %p103
        %p273 = pneg %p127
        %p274 = pneg %p124
        %p275 = pneg %p148
        %p276 = pneg %p145
        %p277 = pneg %p169
        %p278 = pneg %p166
        %p279 = pneg %p195
        %p280 = pneg %p192
        %s281 = sand.u32 %s182, 1
        %s282 = scalar_lea.sflag [#allocation4], %s281
        %s283 = sand.u32 %s182, 1
        %s284 = scalar_lea.vmem [#allocation3], %s283
        %s285 = smul.u32 16, %s22
        %s286 = ssub.s32 25, %s285
        %p287 = scmp.lt.s32.totalorder %s286, 16
        %s288 = scalar_select %p287, %s286, 16
        %s289 = smul.u32 4, %s288
        %p290 = scmp.lt.s32.totalorder %s285, 24
        %s291 = scalar_select %p290, %s285, 24
        %s292 = smul.addr %s291, 4
        %s293 = scalar_lea.vmem %s0, %s292
        %s294 = smul.u32 16, %s22
        %s295 = ssub.s32 25, %s294
        %p296 = scmp.lt.s32.totalorder %s295, 16
        %s297 = scalar_select %p296, %s295, 16
        %s298 = smul.u32 4, %s297
        %v300 = vld [vmem:[%s293] sm:$0xf]
        %v301 = vld [vmem:[%s293 + $0x4] sm:$0xf]
        %v302 = vld [vmem:[%s293 + $0x8] sm:$0xf]
        %v303 = vld [vmem:[%s293 + $0xc] sm:$0xf]
        %v304 = vld [vmem:[%s293 + $0x10] sm:$0xf]
        %v305 = vld [vmem:[%s293 + $0x14] sm:$0xf]
        %v306 = vld [vmem:[%s293 + $0x18] sm:$0xf]
        %v307 = vld [vmem:[%s293 + $0x1c] sm:$0xf]
        %v308 = vld [vmem:[%s293 + $0x20] sm:$0xf]
        %v309 = vld [vmem:[%s293 + $0x24] sm:$0xf]
        %v310 = vld [vmem:[%s293 + $0x28] sm:$0xf]
        %v311 = vld [vmem:[%s293 + $0x2c] sm:$0xf]
        %v312 = vld [vmem:[%s293 + $0x30] sm:$0xf]
        %v313 = vld [vmem:[%s293 + $0x34] sm:$0xf]
        %v314 = vld [vmem:[%s293 + $0x38] sm:$0xf]
        %v315 = vld [vmem:[%s293 + $0x3c] sm:$0xf]
        %v316 = vld [vmem:[%s1] sm:$0xf]
        %v317 = vld [vmem:[%s1 + $0x4] sm:$0xf]
        %v318 = vld [vmem:[%s1 + $0x8] sm:$0xf]
        %v319 = vld [vmem:[%s1 + $0xc] sm:$0xf]
        %v320 = vld [vmem:[%s2] sm:$0x1]
        %v322 = vperm.slane %v320, 0
        %v340 = vunpack.c.l.b16 %v300
        %v341 = vunpack.c.l.b16 %v301
        %v342 = vunpack.c.l.b16 %v302
        %v343 = vunpack.c.l.b16 %v303
        %v344 = vunpack.c.l.b16 %v304
        %v345 = vunpack.c.l.b16 %v305
        %v346 = vunpack.c.l.b16 %v306
        %v347 = vunpack.c.l.b16 %v307
        %v348 = vunpack.c.l.b16 %v308
        %v349 = vunpack.c.l.b16 %v309
        %v350 = vunpack.c.l.b16 %v310
        %v351 = vunpack.c.l.b16 %v311
        %v352 = vunpack.c.l.b16 %v312
        %v353 = vunpack.c.l.b16 %v313
        %v354 = vunpack.c.l.b16 %v314
        %v355 = vunpack.c.l.b16 %v315
        %v356 = vpack.c.b16 %v341, %v340
        %v357 = vpack.c.b16 %v343, %v342
        %v358 = vpack.c.b16 %v345, %v344
        %v359 = vpack.c.b16 %v347, %v346
        %v360 = vpack.c.b16 %v349, %v348
        %v361 = vpack.c.b16 %v351, %v350
        %v362 = vpack.c.b16 %v353, %v352
        %v363 = vpack.c.b16 %v355, %v354
        %v368 = vunpack.c.l.b16 %v316
        %v369 = vunpack.c.l.b16 %v317
        %v370 = vunpack.c.l.b16 %v318
        %v371 = vunpack.c.l.b16 %v319
        %v372 = vpack.c.b16 %v369, %v368
        %v373 = vpack.c.b16 %v371, %v370
        %vm376 = vcmask 261120
        %v378 = vsel %vm376, %v356, 0
        %v381 = vsel %vm376, %v357, 0
        %v384 = vsel %vm376, %v358, 0
        %v387 = vsel %vm376, %v359, 0
        %v390 = vsel %vm376, %v360, 0
        %v393 = vsel %vm376, %v361, 0
        %v396 = vsel %vm376, %v362, 0
        %v399 = vsel %vm376, %v363, 0
        %401 = vmatpush.bf16.msra.mxu0 0
        %402 = vmatpush.bf16.msra.mxu0 0
        %403 = vmatpush.bf16.msra.mxu0 0
        %404 = vmatpush.bf16.msra.mxu0 0
        %405 = vmatpush.bf16.msra.mxu0 0
        %406 = vmatpush.bf16.msra.mxu0 0
        %407 = vmatpush.bf16.msra.mxu0 %v373
        %408 = vmatpush.bf16.msra.mxu0 %v372
        %409 = vmatmul.bf16.gmra.mxu0 %v378
        %v410 = vpop.f32.mrf.mxu0
        %v411 = vadd.f32 %v322, %v410
        %v412 = vpop.f32.mrf.mxu0
        %v413 = vadd.f32 %v322, %v412
        %414 = vmatmul.bf16.gmra.mxu0 %v381
        %v415 = vpop.f32.mrf.mxu0
        %v416 = vadd.f32 %v322, %v415
        %v417 = vpop.f32.mrf.mxu0
        %v418 = vadd.f32 %v322, %v417
        %419 = vmatmul.bf16.gmra.mxu0 %v384
        %v420 = vpop.f32.mrf.mxu0
        %v421 = vadd.f32 %v322, %v420
        %v422 = vpop.f32.mrf.mxu0
        %v423 = vadd.f32 %v322, %v422
        %424 = vmatmul.bf16.gmra.mxu0 %v387
        %v425 = vpop.f32.mrf.mxu0
        %v426 = vadd.f32 %v322, %v425
        %v427 = vpop.f32.mrf.mxu0
        %v428 = vadd.f32 %v322, %v427
        %429 = vmatmul.bf16.gmra.mxu0 %v390
        %v430 = vpop.f32.mrf.mxu0
        %v431 = vadd.f32 %v322, %v430
        %v432 = vpop.f32.mrf.mxu0
        %v433 = vadd.f32 %v322, %v432
        %434 = vmatmul.bf16.gmra.mxu0 %v393
        %v435 = vpop.f32.mrf.mxu0
        %v436 = vadd.f32 %v322, %v435
        %v437 = vpop.f32.mrf.mxu0
        %v438 = vadd.f32 %v322, %v437
        %439 = vmatmul.bf16.gmra.mxu0 %v396
        %v440 = vpop.f32.mrf.mxu0
        %v441 = vadd.f32 %v322, %v440
        %v442 = vpop.f32.mrf.mxu0
        %v443 = vadd.f32 %v322, %v442
        %444 = vmatmul.bf16.gmra.mxu0 %v399
        %v445 = vpop.f32.mrf.mxu0
        %v446 = vadd.f32 %v322, %v445
        %v447 = vpop.f32.mrf.mxu0
        %v448 = vadd.f32 %v322, %v447
        %449 = vdwg.mxu0
        %v450 = vmax.f32 %v411, 0.0
        %v451 = vmax.f32 %v413, 0.0
        %v452 = vmax.f32 %v416, 0.0
        %v453 = vmax.f32 %v418, 0.0
        %v454 = vmax.f32 %v421, 0.0
        %v455 = vmax.f32 %v423, 0.0
        %v456 = vmax.f32 %v426, 0.0
        %v457 = vmax.f32 %v428, 0.0
        %v458 = vmax.f32 %v431, 0.0
        %v459 = vmax.f32 %v433, 0.0
        %v460 = vmax.f32 %v436, 0.0
        %v461 = vmax.f32 %v438, 0.0
        %v462 = vmax.f32 %v441, 0.0
        %v463 = vmax.f32 %v443, 0.0
        %v464 = vmax.f32 %v446, 0.0
        %v465 = vmax.f32 %v448, 0.0
        %v466 = vpack.c.bf16 %v451, %v450
        %v467 = vpack.c.bf16 %v453, %v452
        %v468 = vpack.c.bf16 %v455, %v454
        %v469 = vpack.c.bf16 %v457, %v456
        %v470 = vpack.c.bf16 %v459, %v458
        %v471 = vpack.c.bf16 %v461, %v460
        %v472 = vpack.c.bf16 %v463, %v462
        %v473 = vpack.c.bf16 %v465, %v464
        %v474 = vld [vmem:[%s3] sm:$0xf]
        %v475 = vld [vmem:[%s3 + $0x4] sm:$0xf]
        %v476 = vld [vmem:[%s3 + $0x8] sm:$0xf]
        %v477 = vld [vmem:[%s3 + $0xc] sm:$0xf]
        %v478 = vld [vmem:[%s4] sm:$0x1]
        %v480 = vperm.slane %v478, 0
        %v486 = vunpack.c.l.b16 %v474
        %v487 = vunpack.c.l.b16 %v475
        %v488 = vunpack.c.l.b16 %v476
        %v489 = vunpack.c.l.b16 %v477
        %v490 = vpack.c.b16 %v487, %v486
        %v491 = vpack.c.b16 %v489, %v488
        %v495 = vsel %vm376, %v466, 0
        %v498 = vsel %vm376, %v467, 0
        %v501 = vsel %vm376, %v468, 0
        %v504 = vsel %vm376, %v469, 0
        %v507 = vsel %vm376, %v470, 0
        %v510 = vsel %vm376, %v471, 0
        %v513 = vsel %vm376, %v472, 0
        %v516 = vsel %vm376, %v473, 0
        %518 = vmatpush.bf16.msra.mxu0 0
        %519 = vmatpush.bf16.msra.mxu0 0
        %520 = vmatpush.bf16.msra.mxu0 0
        %521 = vmatpush.bf16.msra.mxu0 0
        %522 = vmatpush.bf16.msra.mxu0 0
        %523 = vmatpush.bf16.msra.mxu0 0
        %524 = vmatpush.bf16.msra.mxu0 %v491
        %525 = vmatpush.bf16.msra.mxu0 %v490
        %526 = vmatmul.bf16.gmra.mxu0 %v495
        %v527 = vpop.f32.mrf.mxu0
        %v528 = vadd.f32 %v480, %v527
        %v529 = vpop.f32.mrf.mxu0
        %v530 = vadd.f32 %v480, %v529
        %531 = vmatmul.bf16.gmra.mxu0 %v498
        %v532 = vpop.f32.mrf.mxu0
        %v533 = vadd.f32 %v480, %v532
        %v534 = vpop.f32.mrf.mxu0
        %v535 = vadd.f32 %v480, %v534
        %536 = vmatmul.bf16.gmra.mxu0 %v501
        %v537 = vpop.f32.mrf.mxu0
        %v538 = vadd.f32 %v480, %v537
        %v539 = vpop.f32.mrf.mxu0
        %v540 = vadd.f32 %v480, %v539
        %541 = vmatmul.bf16.gmra.mxu0 %v504
        %v542 = vpop.f32.mrf.mxu0
        %v543 = vadd.f32 %v480, %v542
        %v544 = vpop.f32.mrf.mxu0
        %v545 = vadd.f32 %v480, %v544
        %546 = vmatmul.bf16.gmra.mxu0 %v507
        %v547 = vpop.f32.mrf.mxu0
        %v548 = vadd.f32 %v480, %v547
        %v549 = vpop.f32.mrf.mxu0
        %v550 = vadd.f32 %v480, %v549
        %551 = vmatmul.bf16.gmra.mxu0 %v510
        %v552 = vpop.f32.mrf.mxu0
        %v553 = vadd.f32 %v480, %v552
        %v554 = vpop.f32.mrf.mxu0
        %v555 = vadd.f32 %v480, %v554
        %556 = vmatmul.bf16.gmra.mxu0 %v513
        %v557 = vpop.f32.mrf.mxu0
        %v558 = vadd.f32 %v480, %v557
        %v559 = vpop.f32.mrf.mxu0
        %v560 = vadd.f32 %v480, %v559
        %561 = vmatmul.bf16.gmra.mxu0 %v516
        %v562 = vpop.f32.mrf.mxu0
        %v563 = vadd.f32 %v480, %v562
        %v564 = vpop.f32.mrf.mxu0
        %v565 = vadd.f32 %v480, %v564
        %566 = vdwg.mxu0
        %v567 = vmax.f32 %v528, 0.0
        %v568 = vmax.f32 %v530, 0.0
        %v569 = vmax.f32 %v533, 0.0
        %v570 = vmax.f32 %v535, 0.0
        %v571 = vmax.f32 %v538, 0.0
        %v572 = vmax.f32 %v540, 0.0
        %v573 = vmax.f32 %v543, 0.0
        %v574 = vmax.f32 %v545, 0.0
        %v575 = vmax.f32 %v548, 0.0
        %v576 = vmax.f32 %v550, 0.0
        %v577 = vmax.f32 %v553, 0.0
        %v578 = vmax.f32 %v555, 0.0
        %v579 = vmax.f32 %v558, 0.0
        %v580 = vmax.f32 %v560, 0.0
        %v581 = vmax.f32 %v563, 0.0
        %v582 = vmax.f32 %v565, 0.0
        %v583 = vpack.c.bf16 %v568, %v567
        %v584 = vpack.c.bf16 %v570, %v569
        %v585 = vpack.c.bf16 %v572, %v571
        %v586 = vpack.c.bf16 %v574, %v573
        %v587 = vpack.c.bf16 %v576, %v575
        %v588 = vpack.c.bf16 %v578, %v577
        %v589 = vpack.c.bf16 %v580, %v579
        %v590 = vpack.c.bf16 %v582, %v581
        %v591 = vld [vmem:[%s5] sm:$0x1]
        %s592 = sld [smem:[#allocation2]]
        %v593 = vstv %s592
        %v595 = vsel %vm376, %v591, 0
        %v598 = vsel %vm376, %v583, 0
        %v601 = vsel %vm376, %v584, 0
        %v604 = vsel %vm376, %v585, 0
        %v607 = vsel %vm376, %v586, 0
        %v610 = vsel %vm376, %v587, 0
        %v613 = vsel %vm376, %v588, 0
        %v616 = vsel %vm376, %v589, 0
        %v619 = vsel %vm376, %v590, 0
        %621 = vmatpush.bf16.xpose.msra.mxu0 %v619
        %622 = vmatpush.bf16.xpose.msra.mxu0 %v616
        %623 = vmatpush.bf16.xpose.msra.mxu0 %v613
        %624 = vmatpush.bf16.xpose.msra.mxu0 %v610
        %625 = vmatpush.bf16.xpose.msra.mxu0 %v607
        %626 = vmatpush.bf16.xpose.msra.mxu0 %v604
        %627 = vmatpush.bf16.xpose.msra.mxu0 %v601
        %628 = vmatpush.bf16.xpose.msra.mxu0 %v598
        %629 = vmatmul.bf16.gmra.mxu0 %v595
        %v630 = vpop.f32.mrf.mxu0
        %v631 = vadd.f32 %v593, %v630
        %v632 = vpop.f32.mrf.mxu0
        %633 = vdwg.mxu0
        %634 = vst [vmem:[%s284] sm:$0x1] %v631
        %s635 = sand.u32 %s182, 1
        %s636 = scalar_lea.sflag [#allocation4], %s635
        %s637 = sand.u32 %s182, 1
        %s638 = scalar_lea.vmem [#allocation3], %s637
        // Predicated region
        $region49: #{tpu_custom_call.1} parent=47 // pred_check
          %p639 = pneg %p192
        $region50: #{tpu_custom_call.1} parent=47 // pred_check_branch
          %641 = sbr.rel (%p639) target = $region52
        $region51: #{tpu_custom_call.1} parent=47 // pred_region
          %643 = vsyncadd %s636, 0
          %s644 = scalar_lea.hbm %s7, %s22
          %s646 = sshll.u32 %s638, 4
          %s647 = int_to_ptr.vmem [resolvable:$true] %s646
          %s648 = sshll.u32 %s644, 4
          %s649 = int_to_ptr.hbm [resolvable:$true] %s648
          %651 = dma.vmem_to_hbm [thread:$0]  %s647, 16, %s649, %s636
        $region52: #{tpu_custom_call.1} parent=47 // pred_fallthru
          _
      $region48: #{tpu_custom_call.1} parent=5 // pred_fallthru
        _
      %p652 = scmp.le.s32.totalorder 2, %s17
      // Predicated region
      $region53: #{tpu_custom_call.1} parent=5 // pred_check
        %p653 = pneg %p652
      $region54: #{tpu_custom_call.1} parent=5 // pred_check_branch
        %655 = sbr.rel (%p653) target = $region56
      $region55: #{tpu_custom_call.1} parent=5 // pred_region
        %s656 = ssub.s32 %s17, 2
        // Predicated region
        $region57: #{tpu_custom_call.1} parent=55 // pred_check
          %p657 = pneg %p198
        $region58: #{tpu_custom_call.1} parent=55 // pred_check_branch
          %659 = sbr.rel (%p657) target = $region60
        $region59: #{tpu_custom_call.1} parent=55 // pred_region
          %s660 = sand.u32 %s183, 1
          %s661 = scalar_lea.sflag [#allocation4], %s660
          %s662 = sand.u32 %s183, 1
          %s663 = scalar_lea.vmem [#allocation3], %s662
          %665 = dma.done %s661, 16
        $region60: #{tpu_custom_call.1} parent=55 // pred_fallthru
          _
      $region56: #{tpu_custom_call.1} parent=5 // pred_fallthru
        _
    $region6: #{tpu_custom_call.1} parent=1 // loop_footer
      %s21 = sadd.s32 1, %s17
    $region7: #{tpu_custom_call.1} parent=1 // loop_footer_branch
      %16 = sbr.rel target = $region3
    $region8: #{tpu_custom_call.1} parent=1 // loop_exit
      _
    %666 = vsyncpa [#allocation4], 1
    %s667 = scalar_lea.sflag [#allocation4], 1
    %668 = vsyncpa %s667, 1

// kernel: tpu_custom_call.1
$region0: #{tpu_custom_call.1}
  #allocation0 [shape = 'u32[]', space=smem, size = 0x4, offset = 0x4, fixed_abs, tag = 'smem constant byte address 0x4 - core index']
  #allocation1 [shape = 'u32[72,128]{1,0:T(1,128)}', space=vmem, size = 0x9000, scoped, tag = 'internal scratch']
  #allocation2 [shape = 'f32[1]{0:T(128)S(6)}', space=smem, size = 0x200, scoped, tag = 'scoped memory for tpu_custom_call.1']
  %s0 = inlined_call_operand.vmem [shape: bf16[200,32], index: 0, kind: input, shape index: {}]
  %s1 = inlined_call_operand.vmem [shape: bf16[32,32], index: 1, kind: input, shape index: {}]
  %s2 = inlined_call_operand.vmem [shape: f32[1,32], index: 2, kind: input, shape index: {}]
  %s3 = inlined_call_operand.vmem [shape: bf16[32,32], index: 3, kind: input, shape index: {}]
  %s4 = inlined_call_operand.vmem [shape: f32[1,32], index: 4, kind: input, shape index: {}]
  %s5 = inlined_call_operand.vmem [shape: bf16[1,32], index: 5, kind: input, shape index: {}]
  %s6 = inlined_call_operand.<no memory space> [shape: f32[1], index: 6, kind: input, shape index: {}]
  %s7 = inlined_call_operand.hbm [shape: f32[1,200], index: 7, kind: output, shape index: {}]
  %s8 = sld [smem:[#allocation0]]
  $region61: #{tpu_custom_call.1} parent=0
    _
  %s10 = ssub.s32 1, %s8
  %s11 = scalar_select 0, %s10, %s8
  %12 = sst [smem:[#allocation2]] %s6
  $region1: #{tpu_custom_call.1} parent=0
    #allocation3 [shape = 'u8[1024]{0}', space=vmem, size = 0x400, scoped, tag = 'output window, operand 0']
    #allocation4 [shape = 's32[2]{0}', space=sflag, size = 0x8, scoped, tag = 'scoped memory for tpu_custom_call.1']
    %13 = vsyncpa [#allocation4], 0
    %s14 = scalar_lea.sflag [#allocation4], 1
    %15 = vsyncpa %s14, 0
    loop: start=0, step=1, limit=4
    $region2: #{tpu_custom_call.1} parent=1 // loop_pre_header
      _
    $region3: #{tpu_custom_call.1} parent=1 // loop_header
      %s17 = sphi 0, %s21
      %p18 = scmp.ge.s32.totalorder %s17, 4
      %s27 = sphi 0, %s29
      %s30 = sphi 0, %s27
      %s31 = sphi 0, %s30
      %s47 = sphi 0, %s31
      %s51 = sphi 0, %s51
      %s53 = sphi 0, %s51
      %s54 = sphi 0, %s53
      %s68 = sphi 0, %s54
      %s72 = sphi 0, %s72
      %s74 = sphi 0, %s72
      %s75 = sphi 0, %s74
      %s89 = sphi 0, %s75
      %s93 = sphi 0, %s93
      %s95 = sphi 0, %s93
      %s96 = sphi 0, %s95
      %s110 = sphi 0, %s96
      %s114 = sphi 0, %s114
      %s116 = sphi 0, %s114
      %s117 = sphi 0, %s116
      %s131 = sphi 0, %s117
      %s135 = sphi 0, %s135
      %s137 = sphi 0, %s135
      %s138 = sphi 0, %s137
      %s152 = sphi 0, %s138
      %s156 = sphi 0, %s156
      %s158 = sphi 0, %s156
      %s159 = sphi 0, %s158
      %s173 = sphi 0, %s159
      %s179 = sphi 0, %s181
      %s182 = sphi 0, %s179
      %s183 = sphi 0, %s182
      %s199 = sphi 0, %s183
    $region4: #{tpu_custom_call.1} parent=1 // loop_header_branch
      %20 = sbr.rel (%p18) target = $region8
    $region5: #{tpu_custom_call.1} parent=1 // loop_body
      %s22 = ssub.s32 %s17, 1
      %s23 = ssub.s32 %s17, 2
      %s24 = sadd.s32 %s17, 1
      %s25 = ssub.s32 %s17, %s24
      %p26 = scmp.eq.s32.totalorder %s25, 0
      %s28 = sadd.s32 %s27, 1
      %s29 = scalar_select %p26, %s27, %s28
      %p32 = pneg %p26
      %p33 = scmp.eq.s32.totalorder %s17, 1
      %p34 = por %p32, %p33
      %p35 = scmp.ne.s32.totalorder %s27, %s30
      %p36 = scmp.eq.s32.totalorder %s17, 0
      %p37 = por %p35, %p36
      %p38 = scmp.ne.s32.totalorder %s27, %s30
      %p39 = scmp.eq.s32.totalorder %s22, 1
      %p40 = por %p38, %p39
      %p41 = scmp.ne.s32.totalorder %s30, %s31
      %p42 = scmp.eq.s32.totalorder %s22, 0
      %p43 = por %p41, %p42
      %p44 = scmp.ne.s32.totalorder %s30, %s31
      %p45 = scmp.eq.s32.totalorder %s23, 1
      %p46 = por %p44, %p45
      %p48 = scmp.ne.s32.totalorder %s31, %s47
      %p49 = scmp.eq.s32.totalorder %s23, 0
      %p50 = por %p48, %p49
      %s52 = sadd.s32 %s51, 1
      %p55 = scmp.eq.s32.totalorder %s17, 1
      %p56 = scmp.ne.s32.totalorder %s51, %s53
      %p57 = scmp.eq.s32.totalorder %s17, 0
      %p58 = por %p56, %p57
      %p59 = scmp.ne.s32.totalorder %s51, %s53
      %p60 = scmp.eq.s32.totalorder %s22, 1
      %p61 = por %p59, %p60
      %p62 = scmp.ne.s32.totalorder %s53, %s54
      %p63 = scmp.eq.s32.totalorder %s22, 0
      %p64 = por %p62, %p63
      %p65 = scmp.ne.s32.totalorder %s53, %s54
      %p66 = scmp.eq.s32.totalorder %s23, 1
      %p67 = por %p65, %p66
      %p69 = scmp.ne.s32.totalorder %s54, %s68
      %p70 = scmp.eq.s32.totalorder %s23, 0
      %p71 = por %p69, %p70
      %s73 = sadd.s32 %s72, 1
      %p76 = scmp.eq.s32.totalorder %s17, 1
      %p77 = scmp.ne.s32.totalorder %s72, %s74
      %p78 = scmp.eq.s32.totalorder %s17, 0
      %p79 = por %p77, %p78
      %p80 = scmp.ne.s32.totalorder %s72, %s74
      %p81 = scmp.eq.s32.totalorder %s22, 1
      %p82 = por %p80, %p81
      %p83 = scmp.ne.s32.totalorder %s74, %s75
      %p84 = scmp.eq.s32.totalorder %s22, 0
      %p85 = por %p83, %p84
      %p86 = scmp.ne.s32.totalorder %s74, %s75
      %p87 = scmp.eq.s32.totalorder %s23, 1
      %p88 = por %p86, %p87
      %p90 = scmp.ne.s32.totalorder %s75, %s89
      %p91 = scmp.eq.s32.totalorder %s23, 0
      %p92 = por %p90, %p91
      %s94 = sadd.s32 %s93, 1
      %p97 = scmp.eq.s32.totalorder %s17, 1
      %p98 = scmp.ne.s32.totalorder %s93, %s95
      %p99 = scmp.eq.s32.totalorder %s17, 0
      %p100 = por %p98, %p99
      %p101 = scmp.ne.s32.totalorder %s93, %s95
      %p102 = scmp.eq.s32.totalorder %s22, 1
      %p103 = por %p101, %p102
      %p104 = scmp.ne.s32.totalorder %s95, %s96
      %p105 = scmp.eq.s32.totalorder %s22, 0
      %p106 = por %p104, %p105
      %p107 = scmp.ne.s32.totalorder %s95, %s96
      %p108 = scmp.eq.s32.totalorder %s23, 1
      %p109 = por %p107, %p108
      %p111 = scmp.ne.s32.totalorder %s96, %s110
      %p112 = scmp.eq.s32.totalorder %s23, 0
      %p113 = por %p111, %p112
      %s115 = sadd.s32 %s114, 1
      %p118 = scmp.eq.s32.totalorder %s17, 1
      %p119 = scmp.ne.s32.totalorder %s114, %s116
      %p120 = scmp.eq.s32.totalorder %s17, 0
      %p121 = por %p119, %p120
      %p122 = scmp.ne.s32.totalorder %s114, %s116
      %p123 = scmp.eq.s32.totalorder %s22, 1
      %p124 = por %p122, %p123
      %p125 = scmp.ne.s32.totalorder %s116, %s117
      %p126 = scmp.eq.s32.totalorder %s22, 0
      %p127 = por %p125, %p126
      %p128 = scmp.ne.s32.totalorder %s116, %s117
      %p129 = scmp.eq.s32.totalorder %s23, 1
      %p130 = por %p128, %p129
      %p132 = scmp.ne.s32.totalorder %s117, %s131
      %p133 = scmp.eq.s32.totalorder %s23, 0
      %p134 = por %p132, %p133
      %s136 = sadd.s32 %s135, 1
      %p139 = scmp.eq.s32.totalorder %s17, 1
      %p140 = scmp.ne.s32.totalorder %s135, %s137
      %p141 = scmp.eq.s32.totalorder %s17, 0
      %p142 = por %p140, %p141
      %p143 = scmp.ne.s32.totalorder %s135, %s137
      %p144 = scmp.eq.s32.totalorder %s22, 1
      %p145 = por %p143, %p144
      %p146 = scmp.ne.s32.totalorder %s137, %s138
      %p147 = scmp.eq.s32.totalorder %s22, 0
      %p148 = por %p146, %p147
      %p149 = scmp.ne.s32.totalorder %s137, %s138
      %p150 = scmp.eq.s32.totalorder %s23, 1
      %p151 = por %p149, %p150
      %p153 = scmp.ne.s32.totalorder %s138, %s152
      %p154 = scmp.eq.s32.totalorder %s23, 0
      %p155 = por %p153, %p154
      %s157 = sadd.s32 %s156, 1
      %p160 = scmp.eq.s32.totalorder %s17, 1
      %p161 = scmp.ne.s32.totalorder %s156, %s158
      %p162 = scmp.eq.s32.totalorder %s17, 0
      %p163 = por %p161, %p162
      %p164 = scmp.ne.s32.totalorder %s156, %s158
      %p165 = scmp.eq.s32.totalorder %s22, 1
      %p166 = por %p164, %p165
      %p167 = scmp.ne.s32.totalorder %s158, %s159
      %p168 = scmp.eq.s32.totalorder %s22, 0
      %p169 = por %p167, %p168
      %p170 = scmp.ne.s32.totalorder %s158, %s159
      %p171 = scmp.eq.s32.totalorder %s23, 1
      %p172 = por %p170, %p171
      %p174 = scmp.ne.s32.totalorder %s159, %s173
      %p175 = scmp.eq.s32.totalorder %s23, 0
      %p176 = por %p174, %p175
      %s177 = ssub.s32 %s17, %s24
      %p178 = scmp.eq.s32.totalorder %s177, 0
      %s180 = sadd.s32 %s179, 1
      %s181 = scalar_select %p178, %s179, %s180
      %p184 = pneg %p178
      %p185 = scmp.eq.s32.totalorder %s17, 1
      %p186 = por %p184, %p185
      %p187 = scmp.ne.s32.totalorder %s179, %s182
      %p188 = scmp.eq.s32.totalorder %s17, 0
      %p189 = por %p187, %p188
      %p190 = scmp.ne.s32.totalorder %s179, %s182
      %p191 = scmp.eq.s32.totalorder %s22, 1
      %p192 = por %p190, %p191
      %p193 = scmp.ne.s32.totalorder %s182, %s183
      %p194 = scmp.eq.s32.totalorder %s22, 0
      %p195 = por %p193, %p194
      %p196 = scmp.ne.s32.totalorder %s182, %s183
      %p197 = scmp.eq.s32.totalorder %s23, 1
      %p198 = por %p196, %p197
      %p200 = scmp.ne.s32.totalorder %s183, %s199
      %p201 = scmp.eq.s32.totalorder %s23, 0
      %p202 = por %p200, %p201
      %p203 = scmp.le.s32.totalorder 1, %s17
      %p204 = scmp.lt.s32.totalorder %s17, 3
      %p205 = pnand %p203, %p204
      %p206 = pneg %p205
      // Predicated region
      $region9: #{tpu_custom_call.1} parent=5 // pred_check
        _
      $region10: #{tpu_custom_call.1} parent=5 // pred_check_branch
        %208 = sbr.rel (%p205) target = $region12
      $region11: #{tpu_custom_call.1} parent=5 // pred_region
        %s209 = ssub.s32 %s17, 1
        // Predicated region
        $region13: #{tpu_custom_call.1} parent=11 // pred_check
          %p210 = pneg %p64
        $region14: #{tpu_custom_call.1} parent=11 // pred_check_branch
          %212 = sbr.rel (%p210) target = $region16
        $region15: #{tpu_custom_call.1} parent=11 // pred_region
          _
        $region16: #{tpu_custom_call.1} parent=11 // pred_fallthru
          _
        // Predicated region
        $region17: #{tpu_custom_call.1} parent=11 // pred_check
          %p213 = pneg %p85
        $region18: #{tpu_custom_call.1} parent=11 // pred_check_branch
          %215 = sbr.rel (%p213) target = $region20
        $region19: #{tpu_custom_call.1} parent=11 // pred_region
          _
        $region20: #{tpu_custom_call.1} parent=11 // pred_fallthru
          _
        // Predicated region
        $region21: #{tpu_custom_call.1} parent=11 // pred_check
          %p216 = pneg %p106
        $region22: #{tpu_custom_call.1} parent=11 // pred_check_branch
          %218 = sbr.rel (%p216) target = $region24
        $region23: #{tpu_custom_call.1} parent=11 // pred_region
          _
        $region24: #{tpu_custom_call.1} parent=11 // pred_fallthru
          _
        // Predicated region
        $region25: #{tpu_custom_call.1} parent=11 // pred_check
          %p219 = pneg %p127
        $region26: #{tpu_custom_call.1} parent=11 // pred_check_branch
          %221 = sbr.rel (%p219) target = $region28
        $region27: #{tpu_custom_call.1} parent=11 // pred_region
          _
        $region28: #{tpu_custom_call.1} parent=11 // pred_fallthru
          _
        // Predicated region
        $region29: #{tpu_custom_call.1} parent=11 // pred_check
          %p222 = pneg %p148
        $region30: #{tpu_custom_call.1} parent=11 // pred_check_branch
          %224 = sbr.rel (%p222) target = $region32
        $region31: #{tpu_custom_call.1} parent=11 // pred_region
          _
        $region32: #{tpu_custom_call.1} parent=11 // pred_fallthru
          _
        // Predicated region
        $region33: #{tpu_custom_call.1} parent=11 // pred_check
          %p225 = pneg %p169
        $region34: #{tpu_custom_call.1} parent=11 // pred_check_branch
          %227 = sbr.rel (%p225) target = $region36
        $region35: #{tpu_custom_call.1} parent=11 // pred_region
          _
        $region36: #{tpu_custom_call.1} parent=11 // pred_fallthru
          _
      $region12: #{tpu_custom_call.1} parent=5 // pred_fallthru
        _
      %p228 = scmp.lt.s32.totalorder %s17, 2
      // Predicated region
      $region37: #{tpu_custom_call.1} parent=5 // pred_check
        %p229 = pneg %p228
      $region38: #{tpu_custom_call.1} parent=5 // pred_check_branch
        %231 = sbr.rel (%p229) target = $region40
      $region39: #{tpu_custom_call.1} parent=5 // pred_region
        // Predicated region
        $region41: #{tpu_custom_call.1} parent=39 // pred_check
          %p232 = pneg %p37
        $region42: #{tpu_custom_call.1} parent=39 // pred_check_branch
          %234 = sbr.rel (%p232) target = $region44
        $region43: #{tpu_custom_call.1} parent=39 // pred_region
          %s235 = smul.u32 16, %s17
          %s236 = ssub.s32 25, %s235
          %p237 = scmp.lt.s32.totalorder %s236, 16
          %s238 = scalar_select %p237, %s236, 16
          %s239 = smul.u32 4, %s238
          %p240 = scmp.lt.s32.totalorder %s235, 24
          %s241 = scalar_select %p240, %s235, 24
          %s242 = smul.addr %s241, 4
          %s243 = scalar_lea.vmem %s0, %s242
          %s244 = smul.u32 16, %s17
          %s245 = ssub.s32 25, %s244
          %p246 = scmp.lt.s32.totalorder %s245, 16
          %s247 = scalar_select %p246, %s245, 16
          %s248 = smul.u32 4, %s247
        $region44: #{tpu_custom_call.1} parent=39 // pred_fallthru
          _
      $region40: #{tpu_custom_call.1} parent=5 // pred_fallthru
        _
      %p249 = scmp.le.s32.totalorder 1, %s17
      %p250 = scmp.lt.s32.totalorder %s17, 3
      %p251 = pnand %p249, %p250
      %p252 = pneg %p251
      // Predicated region
      $region45: #{tpu_custom_call.1} parent=5 // pred_check
        _
      $region46: #{tpu_custom_call.1} parent=5 // pred_check_branch
        %254 = sbr.rel (%p251) target = $region48
      $region47: #{tpu_custom_call.1} parent=5 // pred_region
        %s255 = ssub.s32 %s17, 1
        %s256 = smul.u32 16, %s22
        %s257 = ssub.s32 25, %s256
        %p258 = scmp.lt.s32.totalorder %s257, 16
        %s259 = scalar_select %p258, %s257, 16
        %s260 = smul.u32 4, %s259
        %p261 = scmp.lt.s32.totalorder %s256, 24
        %s262 = scalar_select %p261, %s256, 24
        %s263 = smul.addr %s262, 4
        %s264 = scalar_lea.vmem %s0, %s263
        %p265 = pneg %p43
        %p266 = pneg %p40
        %p267 = pneg %p64
        %p268 = pneg %p61
        %p269 = pneg %p85
        %p270 = pneg %p82
        %p271 = pneg %p106
        %p272 = pneg %p103
        %p273 = pneg %p127
        %p274 = pneg %p124
        %p275 = pneg %p148
        %p276 = pneg %p145
        %p277 = pneg %p169
        %p278 = pneg %p166
        %p279 = pneg %p195
        %p280 = pneg %p192
        %s281 = sand.u32 %s182, 1
        %s282 = scalar_lea.sflag [#allocation4], %s281
        %s283 = sand.u32 %s182, 1
        %s284 = scalar_lea.vmem [#allocation3], %s283
        %s285 = smul.u32 16, %s22
        %s286 = ssub.s32 25, %s285
        %p287 = scmp.lt.s32.totalorder %s286, 16
        %s288 = scalar_select %p287, %s286, 16
        %s289 = smul.u32 4, %s288
        %p290 = scmp.lt.s32.totalorder %s285, 24
        %s291 = scalar_select %p290, %s285, 24
        %s292 = smul.addr %s291, 4
        %s293 = scalar_lea.vmem %s0, %s292
        %s294 = smul.u32 16, %s22
        %s295 = ssub.s32 25, %s294
        %p296 = scmp.lt.s32.totalorder %s295, 16
        %s297 = scalar_select %p296, %s295, 16
        %s298 = smul.u32 4, %s297
        %v300 = vld [vmem:[%s293] sm:$0xf]
        %v301 = vld [vmem:[%s293 + $0x4] sm:$0xf]
        %v302 = vld [vmem:[%s293 + $0x8] sm:$0xf]
        %v303 = vld [vmem:[%s293 + $0xc] sm:$0xf]
        %v304 = vld [vmem:[%s293 + $0x10] sm:$0xf]
        %v305 = vld [vmem:[%s293 + $0x14] sm:$0xf]
        %v306 = vld [vmem:[%s293 + $0x18] sm:$0xf]
        %v307 = vld [vmem:[%s293 + $0x1c] sm:$0xf]
        %v308 = vld [vmem:[%s293 + $0x20] sm:$0xf]
        %v309 = vld [vmem:[%s293 + $0x24] sm:$0xf]
        %v310 = vld [vmem:[%s293 + $0x28] sm:$0xf]
        %v311 = vld [vmem:[%s293 + $0x2c] sm:$0xf]
        %v312 = vld [vmem:[%s293 + $0x30] sm:$0xf]
        %v313 = vld [vmem:[%s293 + $0x34] sm:$0xf]
        %v314 = vld [vmem:[%s293 + $0x38] sm:$0xf]
        %v315 = vld [vmem:[%s293 + $0x3c] sm:$0xf]
        %v316 = vld [vmem:[%s1] sm:$0xf]
        %v317 = vld [vmem:[%s1 + $0x4] sm:$0xf]
        %v318 = vld [vmem:[%s1 + $0x8] sm:$0xf]
        %v319 = vld [vmem:[%s1 + $0xc] sm:$0xf]
        %v320 = vld [vmem:[%s2] sm:$0x1]
        %v322 = vperm.slane %v320, 0
        %v340 = vunpack.c.l.b16 %v300
        %v341 = vunpack.c.l.b16 %v301
        %v342 = vunpack.c.l.b16 %v302
        %v343 = vunpack.c.l.b16 %v303
        %v344 = vunpack.c.l.b16 %v304
        %v345 = vunpack.c.l.b16 %v305
        %v346 = vunpack.c.l.b16 %v306
        %v347 = vunpack.c.l.b16 %v307
        %v348 = vunpack.c.l.b16 %v308
        %v349 = vunpack.c.l.b16 %v309
        %v350 = vunpack.c.l.b16 %v310
        %v351 = vunpack.c.l.b16 %v311
        %v352 = vunpack.c.l.b16 %v312
        %v353 = vunpack.c.l.b16 %v313
        %v354 = vunpack.c.l.b16 %v314
        %v355 = vunpack.c.l.b16 %v315
        %v356 = vpack.c.b16 %v341, %v340
        %v357 = vpack.c.b16 %v343, %v342
        %v358 = vpack.c.b16 %v345, %v344
        %v359 = vpack.c.b16 %v347, %v346
        %v360 = vpack.c.b16 %v349, %v348
        %v361 = vpack.c.b16 %v351, %v350
        %v362 = vpack.c.b16 %v353, %v352
        %v363 = vpack.c.b16 %v355, %v354
        %v368 = vunpack.c.l.b16 %v316
        %v369 = vunpack.c.l.b16 %v317
        %v370 = vunpack.c.l.b16 %v318
        %v371 = vunpack.c.l.b16 %v319
        %v372 = vpack.c.b16 %v369, %v368
        %v373 = vpack.c.b16 %v371, %v370
        %vm376 = vcmask 261120
        %v378 = vsel %vm376, %v356, 0
        %v381 = vsel %vm376, %v357, 0
        %v384 = vsel %vm376, %v358, 0
        %v387 = vsel %vm376, %v359, 0
        %v390 = vsel %vm376, %v360, 0
        %v393 = vsel %vm376, %v361, 0
        %v396 = vsel %vm376, %v362, 0
        %v399 = vsel %vm376, %v363, 0
        %401 = vmatpush.bf16.msra.mxu0 0
        %402 = vmatpush.bf16.msra.mxu0 0
        %403 = vmatpush.bf16.msra.mxu0 0
        %404 = vmatpush.bf16.msra.mxu0 0
        %405 = vmatpush.bf16.msra.mxu0 0
        %406 = vmatpush.bf16.msra.mxu0 0
        %407 = vmatpush.bf16.msra.mxu0 %v373
        %408 = vmatpush.bf16.msra.mxu0 %v372
        %409 = vmatmul.bf16.gmra.mxu0 %v378
        %v410 = vpop.f32.mrf.mxu0
        %v411 = vadd.f32 %v322, %v410
        %v412 = vpop.f32.mrf.mxu0
        %v413 = vadd.f32 %v322, %v412
        %414 = vmatmul.bf16.gmra.mxu0 %v381
        %v415 = vpop.f32.mrf.mxu0
        %v416 = vadd.f32 %v322, %v415
        %v417 = vpop.f32.mrf.mxu0
        %v418 = vadd.f32 %v322, %v417
        %419 = vmatmul.bf16.gmra.mxu0 %v384
        %v420 = vpop.f32.mrf.mxu0
        %v421 = vadd.f32 %v322, %v420
        %v422 = vpop.f32.mrf.mxu0
        %v423 = vadd.f32 %v322, %v422
        %424 = vmatmul.bf16.gmra.mxu0 %v387
        %v425 = vpop.f32.mrf.mxu0
        %v426 = vadd.f32 %v322, %v425
        %v427 = vpop.f32.mrf.mxu0
        %v428 = vadd.f32 %v322, %v427
        %429 = vmatmul.bf16.gmra.mxu0 %v390
        %v430 = vpop.f32.mrf.mxu0
        %v431 = vadd.f32 %v322, %v430
        %v432 = vpop.f32.mrf.mxu0
        %v433 = vadd.f32 %v322, %v432
        %434 = vmatmul.bf16.gmra.mxu0 %v393
        %v435 = vpop.f32.mrf.mxu0
        %v436 = vadd.f32 %v322, %v435
        %v437 = vpop.f32.mrf.mxu0
        %v438 = vadd.f32 %v322, %v437
        %439 = vmatmul.bf16.gmra.mxu0 %v396
        %v440 = vpop.f32.mrf.mxu0
        %v441 = vadd.f32 %v322, %v440
        %v442 = vpop.f32.mrf.mxu0
        %v443 = vadd.f32 %v322, %v442
        %444 = vmatmul.bf16.gmra.mxu0 %v399
        %v445 = vpop.f32.mrf.mxu0
        %v446 = vadd.f32 %v322, %v445
        %v447 = vpop.f32.mrf.mxu0
        %v448 = vadd.f32 %v322, %v447
        %449 = vdwg.mxu0
        %v450 = vmax.f32 %v411, 0.0
        %v451 = vmax.f32 %v413, 0.0
        %v452 = vmax.f32 %v416, 0.0
        %v453 = vmax.f32 %v418, 0.0
        %v454 = vmax.f32 %v421, 0.0
        %v455 = vmax.f32 %v423, 0.0
        %v456 = vmax.f32 %v426, 0.0
        %v457 = vmax.f32 %v428, 0.0
        %v458 = vmax.f32 %v431, 0.0
        %v459 = vmax.f32 %v433, 0.0
        %v460 = vmax.f32 %v436, 0.0
        %v461 = vmax.f32 %v438, 0.0
        %v462 = vmax.f32 %v441, 0.0
        %v463 = vmax.f32 %v443, 0.0
        %v464 = vmax.f32 %v446, 0.0
        %v465 = vmax.f32 %v448, 0.0
        %v466 = vpack.c.bf16 %v451, %v450
        %v467 = vpack.c.bf16 %v453, %v452
        %v468 = vpack.c.bf16 %v455, %v454
        %v469 = vpack.c.bf16 %v457, %v456
        %v470 = vpack.c.bf16 %v459, %v458
        %v471 = vpack.c.bf16 %v461, %v460
        %v472 = vpack.c.bf16 %v463, %v462
        %v473 = vpack.c.bf16 %v465, %v464
        %v474 = vld [vmem:[%s3] sm:$0xf]
        %v475 = vld [vmem:[%s3 + $0x4] sm:$0xf]
        %v476 = vld [vmem:[%s3 + $0x8] sm:$0xf]
        %v477 = vld [vmem:[%s3 + $0xc] sm:$0xf]
        %v478 = vld [vmem:[%s4] sm:$0x1]
        %v480 = vperm.slane %v478, 0
        %v486 = vunpack.c.l.b16 %v474
        %v487 = vunpack.c.l.b16 %v475
        %v488 = vunpack.c.l.b16 %v476
        %v489 = vunpack.c.l.b16 %v477
        %v490 = vpack.c.b16 %v487, %v486
        %v491 = vpack.c.b16 %v489, %v488
        %v495 = vsel %vm376, %v466, 0
        %v498 = vsel %vm376, %v467, 0
        %v501 = vsel %vm376, %v468, 0
        %v504 = vsel %vm376, %v469, 0
        %v507 = vsel %vm376, %v470, 0
        %v510 = vsel %vm376, %v471, 0
        %v513 = vsel %vm376, %v472, 0
        %v516 = vsel %vm376, %v473, 0
        %518 = vmatpush.bf16.msra.mxu0 0
        %519 = vmatpush.bf16.msra.mxu0 0
        %520 = vmatpush.bf16.msra.mxu0 0
        %521 = vmatpush.bf16.msra.mxu0 0
        %522 = vmatpush.bf16.msra.mxu0 0
        %523 = vmatpush.bf16.msra.mxu0 0
        %524 = vmatpush.bf16.msra.mxu0 %v491
        %525 = vmatpush.bf16.msra.mxu0 %v490
        %526 = vmatmul.bf16.gmra.mxu0 %v495
        %v527 = vpop.f32.mrf.mxu0
        %v528 = vadd.f32 %v480, %v527
        %v529 = vpop.f32.mrf.mxu0
        %v530 = vadd.f32 %v480, %v529
        %531 = vmatmul.bf16.gmra.mxu0 %v498
        %v532 = vpop.f32.mrf.mxu0
        %v533 = vadd.f32 %v480, %v532
        %v534 = vpop.f32.mrf.mxu0
        %v535 = vadd.f32 %v480, %v534
        %536 = vmatmul.bf16.gmra.mxu0 %v501
        %v537 = vpop.f32.mrf.mxu0
        %v538 = vadd.f32 %v480, %v537
        %v539 = vpop.f32.mrf.mxu0
        %v540 = vadd.f32 %v480, %v539
        %541 = vmatmul.bf16.gmra.mxu0 %v504
        %v542 = vpop.f32.mrf.mxu0
        %v543 = vadd.f32 %v480, %v542
        %v544 = vpop.f32.mrf.mxu0
        %v545 = vadd.f32 %v480, %v544
        %546 = vmatmul.bf16.gmra.mxu0 %v507
        %v547 = vpop.f32.mrf.mxu0
        %v548 = vadd.f32 %v480, %v547
        %v549 = vpop.f32.mrf.mxu0
        %v550 = vadd.f32 %v480, %v549
        %551 = vmatmul.bf16.gmra.mxu0 %v510
        %v552 = vpop.f32.mrf.mxu0
        %v553 = vadd.f32 %v480, %v552
        %v554 = vpop.f32.mrf.mxu0
        %v555 = vadd.f32 %v480, %v554
        %556 = vmatmul.bf16.gmra.mxu0 %v513
        %v557 = vpop.f32.mrf.mxu0
        %v558 = vadd.f32 %v480, %v557
        %v559 = vpop.f32.mrf.mxu0
        %v560 = vadd.f32 %v480, %v559
        %561 = vmatmul.bf16.gmra.mxu0 %v516
        %v562 = vpop.f32.mrf.mxu0
        %v563 = vadd.f32 %v480, %v562
        %v564 = vpop.f32.mrf.mxu0
        %v565 = vadd.f32 %v480, %v564
        %566 = vdwg.mxu0
        %v567 = vmax.f32 %v528, 0.0
        %v568 = vmax.f32 %v530, 0.0
        %v569 = vmax.f32 %v533, 0.0
        %v570 = vmax.f32 %v535, 0.0
        %v571 = vmax.f32 %v538, 0.0
        %v572 = vmax.f32 %v540, 0.0
        %v573 = vmax.f32 %v543, 0.0
        %v574 = vmax.f32 %v545, 0.0
        %v575 = vmax.f32 %v548, 0.0
        %v576 = vmax.f32 %v550, 0.0
        %v577 = vmax.f32 %v553, 0.0
        %v578 = vmax.f32 %v555, 0.0
        %v579 = vmax.f32 %v558, 0.0
        %v580 = vmax.f32 %v560, 0.0
        %v581 = vmax.f32 %v563, 0.0
        %v582 = vmax.f32 %v565, 0.0
        %v583 = vpack.c.bf16 %v568, %v567
        %v584 = vpack.c.bf16 %v570, %v569
        %v585 = vpack.c.bf16 %v572, %v571
        %v586 = vpack.c.bf16 %v574, %v573
        %v587 = vpack.c.bf16 %v576, %v575
        %v588 = vpack.c.bf16 %v578, %v577
        %v589 = vpack.c.bf16 %v580, %v579
        %v590 = vpack.c.bf16 %v582, %v581
        %v591 = vld [vmem:[%s5] sm:$0x1]
        %s592 = sld [smem:[#allocation2]]
        %v593 = vstv %s592
        %v595 = vsel %vm376, %v591, 0
        %v598 = vsel %vm376, %v583, 0
        %v601 = vsel %vm376, %v584, 0
        %v604 = vsel %vm376, %v585, 0
        %v607 = vsel %vm376, %v586, 0
        %v610 = vsel %vm376, %v587, 0
        %v613 = vsel %vm376, %v588, 0
        %v616 = vsel %vm376, %v589, 0
        %v619 = vsel %vm376, %v590, 0
        %621 = vmatpush.bf16.xpose.msra.mxu0 %v619
        %622 = vmatpush.bf16.xpose.msra.mxu0 %v616
        %623 = vmatpush.bf16.xpose.msra.mxu0 %v613
        %624 = vmatpush.bf16.xpose.msra.mxu0 %v610
        %625 = vmatpush.bf16.xpose.msra.mxu0 %v607
        %626 = vmatpush.bf16.xpose.msra.mxu0 %v604
        %627 = vmatpush.bf16.xpose.msra.mxu0 %v601
        %628 = vmatpush.bf16.xpose.msra.mxu0 %v598
        %629 = vmatmul.bf16.gmra.mxu0 %v595
        %v630 = vpop.f32.mrf.mxu0
        %v631 = vadd.f32 %v593, %v630
        %v632 = vpop.f32.mrf.mxu0
        %633 = vdwg.mxu0
        %634 = vst [vmem:[%s284] sm:$0x1] %v631
        %s635 = sand.u32 %s182, 1
        %s636 = scalar_lea.sflag [#allocation4], %s635
        %s637 = sand.u32 %s182, 1
        %s638 = scalar_lea.vmem [#allocation3], %s637
        // Predicated region
        $region49: #{tpu_custom_call.1} parent=47 // pred_check
          %p639 = pneg %p192
        $region50: #{tpu_custom_call.1} parent=47 // pred_check_branch
          %641 = sbr.rel (%p639) target = $region52
        $region51: #{tpu_custom_call.1} parent=47 // pred_region
          %643 = vsyncadd %s636, 0
          %s644 = scalar_lea.hbm %s7, %s22
          %s646 = sshll.u32 %s638, 4
          %s647 = int_to_ptr.vmem [resolvable:$true] %s646
          %s648 = sshll.u32 %s644, 4
          %s649 = int_to_ptr.hbm [resolvable:$true] %s648
          %651 = dma.vmem_to_hbm [thread:$0]  %s647, 16, %s649, %s636
        $region52: #{tpu_custom_call.1} parent=47 // pred_fallthru
          _
      $region48: #{tpu_custom_call.1} parent=5 // pred_fallthru
        _
      %p652 = scmp.le.s32.totalorder 2, %s17
      // Predicated region
      $region53: #{tpu_custom_call.1} parent=5 // pred_check
        %p653 = pneg %p652
      $region54: #{tpu_custom_call.1} parent=5 // pred_check_branch
        %655 = sbr.rel (%p653) target = $region56
      $region55: #{tpu_custom_call.1} parent=5 // pred_region
        %s656 = ssub.s32 %s17, 2
        // Predicated region
        $region57: #{tpu_custom_call.1} parent=55 // pred_check
          %p657 = pneg %p198
        $region58: #{tpu_custom_call.1} parent=55 // pred_check_branch
          %659 = sbr.rel (%p657) target = $region60
        $region59: #{tpu_custom_call.1} parent=55 // pred_region
          %s660 = sand.u32 %s183, 1
          %s661 = scalar_lea.sflag [#allocation4], %s660
          %s662 = sand.u32 %s183, 1
          %s663 = scalar_lea.vmem [#allocation3], %s662
          %665 = dma.done %s661, 16
        $region60: #{tpu_custom_call.1} parent=55 // pred_fallthru
          _
      $region56: #{tpu_custom_call.1} parent=5 // pred_fallthru
        _
    $region6: #{tpu_custom_call.1} parent=1 // loop_footer
      %s21 = sadd.s32 1, %s17
    $region7: #{tpu_custom_call.1} parent=1 // loop_footer_branch
      %16 = sbr.rel target = $region3
    $region8: #{tpu_custom_call.1} parent=1 // loop_exit
      _
    %666 = vsyncpa [#allocation4], 1
    %s667 = scalar_lea.sflag [#allocation4], 1
    %668 = vsyncpa %s667, 1

</llo_original>
